<compile_context>
chip_gen: v6e
topology: v6e:2x2x1
jax: 0.10.0
libtpu: 0.0.40
codegen_flags: <defaults>
</compile_context>

<pallas_src>
import jax
import jax.numpy as jnp
import numpy as np
from jax.experimental import pallas as pl
from jax.experimental.pallas import tpu as pltpu


def batch_ensemble_kernel(x_ref, wt_ref, b_ref, o_ref):
    """Grid = (HW_tiles, B_tiles); one MXU matmul + bias per batch row in the block.

    x_ref : (bt, Cin, TL)   input tile  (channels on sublanes, spatial on lanes)
    wt_ref: (Cout, Cin)     fused effective weight, transposed
    b_ref : (Cout, 1)       fused effective bias
    o_ref : (bt, Cout, TL)  output tile (lane-dense; trailing partial block masked)
    """
    wt = wt_ref[...]
    b = b_ref[...]
    # bt is a small static int (<= 8): unrolled Python loop, one clean MXU matmul
    # + lane-dense store per batch row.
    for i in range(x_ref.shape[0]):
        y = jnp.dot(wt, x_ref[i], preferred_element_type=jnp.float32)  # (Cout, TL)
        o_ref[i] = (y + b).astype(o_ref.dtype)


def batch_ensemble_forward(x_nchw, pre, post, w_mat, bias, *,
                           lane_tile=None, batch_tile=None):
    """Eval-path BatchEnsemble forward.

    x_nchw: [B, Cin, H, W]; pre: [n, Cin]; post: [n, Cout];
    w_mat: [Cin, Cout] (1x1-conv weight, (in, out) layout); bias: [Cout].
    lane_tile / batch_tile: optional static overrides for the spatial/batch tiles.
    """
    B, Cin, H, W = x_nchw.shape
    n, Cout = post.shape
    HW = H * W
    itemsize = jnp.dtype(x_nchw.dtype).itemsize

    # --- Fold the ensemble mean into an effective weight / bias (tiny, fuses under jit) ---
    scale = (pre.T @ post) / n                   # [Cin, Cout] = mean_i pre_c * post_o
    w_eff = w_mat * scale                        # [Cin, Cout]
    b_eff = bias * jnp.mean(post, axis=0)        # [Cout]
    wt = jnp.transpose(w_eff)                    # [Cout, Cin]
    b2 = b_eff.reshape(Cout, 1)                  # [Cout, 1]

    x3 = x_nchw.reshape(B, Cin, HW)              # free view, NCHW kept

    # --- Per-generation VMEM budget (v7x: 64 MiB physical; v5e/v6e: 128 MiB) ---
    try:
        vmem_cap = int(pltpu.get_tpu_info().vmem_capacity_bytes)
    except Exception:  # interpret mode / older runtimes
        vmem_cap = 128 << 20
    pipeline_budget = (24 << 20) if vmem_cap <= (64 << 20) else (48 << 20)

    # Weight + bias are constant across the grid but still double-buffered by default.
    param_bytes = 2 * (Cout * Cin + Cout) * 4

    # --- Spatial (lane) tile: multiple of 128, targeting ~2 MiB per X block ---
    target_block_bytes = 2 << 20
    if lane_tile is None:
        budget_tl = (pipeline_budget - param_bytes) // max(2 * (Cin + Cout) * itemsize, 1)
        tl = min(HW, target_block_bytes // max(Cin * itemsize, 1), budget_tl)
        tl = max(128, (tl // 128) * 128)
        if tl >= HW:
            tl = HW                              # full-extent block (always legal)
    else:
        tl = min(int(lane_tile), HW)

    # --- Batch tile: pack several images per grid step when channels are small ---
    if batch_tile is None:
        bt = 1
        if tl == HW:                             # spatial axis exhausted; grow along batch
            per_row = 2 * (Cin + Cout) * tl * itemsize          # dbl-buffered X+out, one row
            by_budget = max(1, (pipeline_budget - param_bytes) // max(per_row, 1))
            by_target = max(1, target_block_bytes // max(Cin * tl * itemsize, 1))
            bt = int(min(B, by_budget, by_target, 8))           # cap kernel unroll
    else:
        bt = int(batch_tile)
    bt = max(1, min(bt, B))

    # Explicit VMEM limit: keep double-buffering alive, leave headroom on v7x.
    working_set = 2 * bt * (Cin + Cout) * tl * itemsize + param_bytes
    vmem_limit = int(min(vmem_cap, max(2 * working_set, 32 << 20)))

    # Advisory cost: purely HBM-bandwidth-bound matmul + bias.
    cost = pl.CostEstimate(
        flops=2 * B * HW * Cin * Cout,
        transcendentals=0,
        bytes_accessed=B * HW * (Cin + Cout) * itemsize + (Cin * Cout + Cout) * 4,
    )

    # Spatial tiles lead the grid so v7x megacore shards the large axis even at B=1.
    grid = (pl.cdiv(HW, tl), pl.cdiv(B, bt))

    out3 = pl.pallas_call(
        batch_ensemble_kernel,
        out_shape=jax.ShapeDtypeStruct((B, Cout, HW), x_nchw.dtype),
        grid_spec=pltpu.PrefetchScalarGridSpec(
            num_scalar_prefetch=0,
            grid=grid,
            in_specs=[
                pl.BlockSpec((bt, Cin, tl), lambda l, b: (b, 0, l)),   # X tile
                pl.BlockSpec((Cout, Cin), lambda l, b: (0, 0)),        # W_eff^T (constant)
                pl.BlockSpec((Cout, 1), lambda l, b: (0, 0)),          # b_eff  (constant)
            ],
            out_specs=pl.BlockSpec((bt, Cout, tl), lambda l, b: (b, 0, l)),
        ),
        compiler_params=pltpu.CompilerParams(
            dimension_semantics=("parallel", "parallel"),
            vmem_limit_bytes=vmem_limit),
        cost_estimate=cost,
    )(x3, wt, b2)

    return out3.reshape(B, Cout, H, W)           # free reshape back to NCHW


if __name__ == "__main__":
    B, Cin, Cout, H, W, n = 2, 4, 8, 16, 16, 4

    key = jax.random.PRNGKey(0)
    k1, k2, k3, k4, k5 = jax.random.split(key, 5)
    x = jax.random.normal(k1, (B, Cin, H, W), jnp.float32)

    # BatchEnsembleWrapper params: pre ~ N(1, 0.1) [n, Cin], post ~ N(1, 0.1) [n, Cout]
    pre = 1.0 + 0.1 * jax.random.normal(k2, (n, Cin), jnp.float32)
    post = 1.0 + 0.1 * jax.random.normal(k3, (n, Cout), jnp.float32)

    # Wrapped mod: 1x1 Conv2d(Cin -> Cout) with bias (== per-pixel linear layer).
    w_mat = 0.1 * jax.random.normal(k4, (Cin, Cout), jnp.float32)
    bias = 0.1 * jax.random.normal(k5, (Cout,), jnp.float32)

    # jit the wrapper so the tiny ensemble-fold ops fuse into one launch.
    fwd = jax.jit(batch_ensemble_forward, static_argnames=("lane_tile", "batch_tile"))

    # Pure-JAX reference of the eval path (explicit mean over ensemble members,
    # matching the PyTorch forward exactly — validates the algebraic fusion).
    def reference(x_nchw, pre, post, w_mat, bias):
        outs = []
        for i in range(pre.shape[0]):
            xs = x_nchw * pre[i][None, :, None, None]
            y = jnp.einsum("bchw,co->bohw", xs, w_mat) + bias[None, :, None, None]
            outs.append(y * post[i][None, :, None, None])
        return jnp.mean(jnp.stack(outs), axis=0)

    out = jax.block_until_ready(fwd(x, pre, post, w_mat, bias))
    ref = jax.block_until_ready(reference(x, pre, post, w_mat, bias))
    np.testing.assert_allclose(np.asarray(out), np.asarray(ref), rtol=1e-5, atol=1e-5)

    # Second check: spatial extent not a multiple of 128 with a forced small lane
    # tile — exercises the non-dividing grid / masked trailing-block path.
    H2 = W2 = 20
    x2 = jax.random.normal(jax.random.PRNGKey(1), (B, Cin, H2, W2), jnp.float32)
    out2 = jax.block_until_ready(
        fwd(x2, pre, post, w_mat, bias, lane_tile=128, batch_tile=1))
    ref2 = jax.block_until_ready(reference(x2, pre, post, w_mat, bias))
    np.testing.assert_allclose(np.asarray(out2), np.asarray(ref2), rtol=1e-5, atol=1e-5)

    print("KERNEL_OK")
</pallas_src>

<mosaic_0001>
module attributes {stable_mosaic.version = 11 : i64} {
  func.func @batch_ensemble_kernel(%arg0: i32, %arg1: i32, %arg2: memref<2x4x256xf32, #tpu.memory_space<vmem>>, %arg3: memref<8x4xf32, #tpu.memory_space<vmem>>, %arg4: memref<8x1xf32, #tpu.memory_space<vmem>>, %arg5: memref<2x8x256xf32, #tpu.memory_space<vmem>>) attributes {dimension_semantics = [#tpu.dimension_semantics<parallel>, #tpu.dimension_semantics<parallel>], iteration_bounds = array<i64: 1, 1>, scalar_prefetch = 0 : i64, scratch_operands = 0 : i64, tpu.core_type = #tpu.core_type<tc>, window_params = [{transform_indices = @transform_0, window_bounds = array<i64: 2, 4, 256>}, {pipeline_mode = #tpu.pipeline_mode<synchronous>, transform_indices = @transform_1, window_bounds = array<i64: 8, 4>}, {pipeline_mode = #tpu.pipeline_mode<synchronous>, transform_indices = @transform_2, window_bounds = array<i64: 8, 1>}, {transform_indices = @transform_3, window_bounds = array<i64: 2, 8, 256>}]} {
    %c0 = arith.constant 0 : index
    %c0_0 = arith.constant 0 : index
    %0 = vector.load %arg3[%c0, %c0_0] : memref<8x4xf32, #tpu.memory_space<vmem>>, vector<8x4xf32>
    %c0_1 = arith.constant 0 : index
    %c0_2 = arith.constant 0 : index
    %1 = vector.load %arg4[%c0_1, %c0_2] : memref<8x1xf32, #tpu.memory_space<vmem>>, vector<8x1xf32>
    %c0_3 = arith.constant 0 : index
    %c0_4 = arith.constant 0 : index
    %c0_5 = arith.constant 0 : index
    %2 = vector.load %arg2[%c0_3, %c0_4, %c0_5] : memref<2x4x256xf32, #tpu.memory_space<vmem>>, vector<1x4x256xf32>
    %3 = vector.shape_cast %2 : vector<1x4x256xf32> to vector<4x256xf32>
    %cst = arith.constant dense<0.000000e+00> : vector<8x256xf32>
    %4 = tpu.matmul %0, %3, %cst {dimension_numbers = #tpu.dot_dimension_numbers<[1], [0], [0], [1], [0, 0, 1, 1], [], []>} : vector<8x4xf32>, vector<4x256xf32>, vector<8x256xf32> -> vector<8x256xf32>
    %5 = vector.broadcast %1 : vector<8x1xf32> to vector<8x256xf32>
    %6 = arith.addf %4, %5 : vector<8x256xf32>
    %c0_6 = arith.constant 0 : index
    %c0_7 = arith.constant 0 : index
    %c0_8 = arith.constant 0 : index
    %7 = vector.load %arg5[%c0_6, %c0_7, %c0_8] : memref<2x8x256xf32, #tpu.memory_space<vmem>>, vector<1x8x256xf32>
    %8 = vector.shape_cast %7 : vector<1x8x256xf32> to vector<8x256xf32>
    %9 = vector.shape_cast %6 : vector<8x256xf32> to vector<1x8x256xf32>
    tpu.vector_store %arg5[%c0_6, %c0_7, %c0_8], %9 {strides = array<i32>} : memref<2x8x256xf32, #tpu.memory_space<vmem>>, vector<1x8x256xf32>,
    %c1 = arith.constant 1 : index
    %c0_9 = arith.constant 0 : index
    %c0_10 = arith.constant 0 : index
    %10 = vector.load %arg2[%c1, %c0_9, %c0_10] : memref<2x4x256xf32, #tpu.memory_space<vmem>>, vector<1x4x256xf32>
    %11 = vector.shape_cast %10 : vector<1x4x256xf32> to vector<4x256xf32>
    %cst_11 = arith.constant dense<0.000000e+00> : vector<8x256xf32>
    %12 = tpu.matmul %0, %11, %cst_11 {dimension_numbers = #tpu.dot_dimension_numbers<[1], [0], [0], [1], [0, 0, 1, 1], [], []>} : vector<8x4xf32>, vector<4x256xf32>, vector<8x256xf32> -> vector<8x256xf32>
    %13 = vector.broadcast %1 : vector<8x1xf32> to vector<8x256xf32>
    %14 = arith.addf %12, %13 : vector<8x256xf32>
    %c1_12 = arith.constant 1 : index
    %c0_13 = arith.constant 0 : index
    %c0_14 = arith.constant 0 : index
    %15 = vector.load %arg5[%c1_12, %c0_13, %c0_14] : memref<2x8x256xf32, #tpu.memory_space<vmem>>, vector<1x8x256xf32>
    %16 = vector.shape_cast %15 : vector<1x8x256xf32> to vector<8x256xf32>
    %17 = vector.shape_cast %14 : vector<8x256xf32> to vector<1x8x256xf32>
    tpu.vector_store %arg5[%c1_12, %c0_13, %c0_14], %17 {strides = array<i32>} : memref<2x8x256xf32, #tpu.memory_space<vmem>>, vector<1x8x256xf32>,
    return
  }
  func.func @transform_0(%arg0: i32, %arg1: i32) -> (i32, i32, i32) {
    %c0_i32 = arith.constant 0 : i32
    %c0_i32_0 = arith.constant 0 : i32
    return %arg1, %c0_i32, %arg0 : i32, i32, i32
  }
  func.func @transform_1(%arg0: i32, %arg1: i32) -> (i32, i32) {
    %c0_i32 = arith.constant 0 : i32
    %c0_i32_0 = arith.constant 0 : i32
    %c0_i32_1 = arith.constant 0 : i32
    return %c0_i32, %c0_i32_0 : i32, i32
  }
  func.func @transform_2(%arg0: i32, %arg1: i32) -> (i32, i32) {
    %c0_i32 = arith.constant 0 : i32
    %c0_i32_0 = arith.constant 0 : i32
    %c0_i32_1 = arith.constant 0 : i32
    return %c0_i32, %c0_i32_0 : i32, i32
  }
  func.func @transform_3(%arg0: i32, %arg1: i32) -> (i32, i32, i32) {
    %c0_i32 = arith.constant 0 : i32
    %c0_i32_0 = arith.constant 0 : i32
    return %arg1, %c0_i32, %arg0 : i32, i32, i32
  }
}

</mosaic_0001>

<llo_original>
// kernel: batch_ensemble_forward.1
$region0: #{batch_ensemble_forward.1}
  #allocation0 [shape = 'u32[]', space=smem, size = 0x4, offset = 0x4, fixed_abs, tag = 'smem constant byte address 0x4 - core index']
  #allocation1 [shape = 'u32[144,128]{1,0:T(1,128)}', space=vmem, size = 0x12000, scoped, tag = 'internal scratch']
  %s0 = inlined_call_operand.vmem [shape: f32[2,4,256], index: 0, kind: input, shape index: {}]
  %s1 = inlined_call_operand.vmem [shape: f32[8,4], index: 1, kind: input, shape index: {}]
  %s2 = inlined_call_operand.vmem [shape: f32[8,1], index: 2, kind: input, shape index: {}]
  %s3 = inlined_call_operand.vmem [shape: f32[2,8,256], index: 3, kind: output, shape index: {}]
  %s4 = sld [smem:[#allocation0]]
  $region22: #{batch_ensemble_forward.1} parent=0
    _
  %s6 = ssub.s32 1, %s4
  %s7 = scalar_select 0, %s6, %s4
  // Predicated region
  $region2: #{batch_ensemble_forward.1} parent=0 // pred_check
    _
  $region3: #{batch_ensemble_forward.1} parent=0 // pred_check_branch
    %9 = sbr.rel (0) target = $region5
  $region4: #{batch_ensemble_forward.1} parent=0 // pred_region
    _
  $region5: #{batch_ensemble_forward.1} parent=0 // pred_fallthru
    _
  // Predicated region
  $region6: #{batch_ensemble_forward.1} parent=0 // pred_check
    _
  $region7: #{batch_ensemble_forward.1} parent=0 // pred_check_branch
    %11 = sbr.rel (0) target = $region9
  $region8: #{batch_ensemble_forward.1} parent=0 // pred_region
    _
  $region9: #{batch_ensemble_forward.1} parent=0 // pred_fallthru
    _
  // Predicated region
  $region10: #{batch_ensemble_forward.1} parent=0 // pred_check
    _
  $region11: #{batch_ensemble_forward.1} parent=0 // pred_check_branch
    %13 = sbr.rel (0) target = $region13
  $region12: #{batch_ensemble_forward.1} parent=0 // pred_region
    _
  $region13: #{batch_ensemble_forward.1} parent=0 // pred_fallthru
    _
  %v14 = vld [vmem:[%s1] sm:$0xff]
  %v15 = vld [vmem:[%s2] sm:$0xff]
  %v16 = vld [vmem:[%s0] sm:$0xff]
  %18 = vset.pattern.permute.xlu0 0
  %19 = vperm.xlu0 %18, %v15
  %v20 = vpop.permute.xlu0 %19
  %v23 = vcombine.high %v16, %v16
  %vm24 = vcmask 31744
  %v26 = vsel %vm24, %v14, 0
  %vm28 = vcmask 1043456
  %v29 = vsel %vm28, %v16, 0
  %v31 = vsel %vm28, %v23, 0
  %33 = vmatprep.subr.mxu0 0.0
  %34 = vmatpush1.msra.mxu0 0.0
  %35 = vmatprep.subr.mxu0 0.0
  %36 = vmatpush1.msra.mxu0 0.0
  %37 = vmatprep.subr.mxu0 0.0
  %38 = vmatpush1.msra.mxu0 0.0
  %39 = vmatprep.subr.mxu0 0.0
  %40 = vmatpush1.msra.mxu0 0.0
  %41 = vmatprep.subr.mxu0 0.0
  %42 = vmatpush1.msra.mxu0 0.0
  %43 = vmatprep.subr.mxu0 0.0
  %44 = vmatpush1.msra.mxu0 0.0
  %45 = vmatprep.subr.mxu0 0.0
  %46 = vmatpush1.msra.mxu0 0.0
  %47 = vmatprep.subr.mxu0 0.0
  %48 = vmatpush1.msra.mxu0 0.0
  %49 = vmatprep.subr.mxu0 0.0
  %50 = vmatpush1.msra.mxu0 0.0
  %51 = vmatprep.subr.mxu0 0.0
  %52 = vmatpush1.msra.mxu0 0.0
  %53 = vmatprep.subr.mxu0 0.0
  %54 = vmatpush1.msra.mxu0 0.0
  %55 = vmatprep.subr.mxu0 0.0
  %56 = vmatpush1.msra.mxu0 0.0
  %57 = vmatprep.subr.mxu0 0.0
  %58 = vmatpush1.msra.mxu0 0.0
  %59 = vmatprep.subr.mxu0 0.0
  %60 = vmatpush1.msra.mxu0 0.0
  %61 = vmatprep.subr.mxu0 0.0
  %62 = vmatpush1.msra.mxu0 0.0
  %63 = vmatprep.subr.mxu0 %v31
  %64 = vmatpush1.msra.mxu0 %v29
  %65 = vmatprep.subr.mxu0 0.0
  %66 = vmatpush2.msra.mxu0 0.0
  %67 = vmatprep.subr.mxu0 0.0
  %68 = vmatpush2.msra.mxu0 0.0
  %69 = vmatprep.subr.mxu0 0.0
  %70 = vmatpush2.msra.mxu0 0.0
  %71 = vmatprep.subr.mxu0 0.0
  %72 = vmatpush2.msra.mxu0 0.0
  %73 = vmatprep.subr.mxu0 0.0
  %74 = vmatpush2.msra.mxu0 0.0
  %75 = vmatprep.subr.mxu0 0.0
  %76 = vmatpush2.msra.mxu0 0.0
  %77 = vmatprep.subr.mxu0 0.0
  %78 = vmatpush2.msra.mxu0 0.0
  %79 = vmatprep.subr.mxu0 0.0
  %80 = vmatpush2.msra.mxu0 0.0
  %81 = vmatprep.subr.mxu0 0.0
  %82 = vmatpush2.msra.mxu0 0.0
  %83 = vmatprep.subr.mxu0 0.0
  %84 = vmatpush2.msra.mxu0 0.0
  %85 = vmatprep.subr.mxu0 0.0
  %86 = vmatpush2.msra.mxu0 0.0
  %87 = vmatprep.subr.mxu0 0.0
  %88 = vmatpush2.msra.mxu0 0.0
  %89 = vmatprep.subr.mxu0 0.0
  %90 = vmatpush2.msra.mxu0 0.0
  %91 = vmatprep.subr.mxu0 0.0
  %92 = vmatpush2.msra.mxu0 0.0
  %93 = vmatprep.subr.mxu0 0.0
  %94 = vmatpush2.msra.mxu0 0.0
  %95 = vmatprep.subr.mxu0 0.0
  %96 = vmatpush2.msra.mxu0 0.0
  %97 = vmatprep.mubr.f32.mxu0 0.0
  %98 = vmatmul.mubr.f32.gmra.mxu0 %v26
  %v99 = vpop.f32.mrf.mxu0
  %v100 = vadd.f32 %v20, %v99
  %v101 = vpop.f32.mrf.mxu0
  %v102 = vadd.f32 %v20, %v101
  %103 = vdwg.mxu0
  %104 = vst [vmem:[%s3] sm:$0xff] %v100
  %105 = vst [vmem:[%s3 + $0x8] sm:$0xff] %v102
  %s106 = scalar_lea.vmem %s0, 8
  %v107 = vld [vmem:[%s106] sm:$0xff]
  %v109 = vcombine.high %v107, %v107
  %v110 = vsel %vm28, %v107, 0
  %v112 = vsel %vm28, %v109, 0
  %114 = vmatprep.subr.mxu0 0.0
  %115 = vmatpush1.msra.mxu0 0.0
  %116 = vmatprep.subr.mxu0 0.0
  %117 = vmatpush1.msra.mxu0 0.0
  %118 = vmatprep.subr.mxu0 0.0
  %119 = vmatpush1.msra.mxu0 0.0
  %120 = vmatprep.subr.mxu0 0.0
  %121 = vmatpush1.msra.mxu0 0.0
  %122 = vmatprep.subr.mxu0 0.0
  %123 = vmatpush1.msra.mxu0 0.0
  %124 = vmatprep.subr.mxu0 0.0
  %125 = vmatpush1.msra.mxu0 0.0
  %126 = vmatprep.subr.mxu0 0.0
  %127 = vmatpush1.msra.mxu0 0.0
  %128 = vmatprep.subr.mxu0 0.0
  %129 = vmatpush1.msra.mxu0 0.0
  %130 = vmatprep.subr.mxu0 0.0
  %131 = vmatpush1.msra.mxu0 0.0
  %132 = vmatprep.subr.mxu0 0.0
  %133 = vmatpush1.msra.mxu0 0.0
  %134 = vmatprep.subr.mxu0 0.0
  %135 = vmatpush1.msra.mxu0 0.0
  %136 = vmatprep.subr.mxu0 0.0
  %137 = vmatpush1.msra.mxu0 0.0
  %138 = vmatprep.subr.mxu0 0.0
  %139 = vmatpush1.msra.mxu0 0.0
  %140 = vmatprep.subr.mxu0 0.0
  %141 = vmatpush1.msra.mxu0 0.0
  %142 = vmatprep.subr.mxu0 0.0
  %143 = vmatpush1.msra.mxu0 0.0
  %144 = vmatprep.subr.mxu0 %v112
  %145 = vmatpush1.msra.mxu0 %v110
  %146 = vmatprep.subr.mxu0 0.0
  %147 = vmatpush2.msra.mxu0 0.0
  %148 = vmatprep.subr.mxu0 0.0
  %149 = vmatpush2.msra.mxu0 0.0
  %150 = vmatprep.subr.mxu0 0.0
  %151 = vmatpush2.msra.mxu0 0.0
  %152 = vmatprep.subr.mxu0 0.0
  %153 = vmatpush2.msra.mxu0 0.0
  %154 = vmatprep.subr.mxu0 0.0
  %155 = vmatpush2.msra.mxu0 0.0
  %156 = vmatprep.subr.mxu0 0.0
  %157 = vmatpush2.msra.mxu0 0.0
  %158 = vmatprep.subr.mxu0 0.0
  %159 = vmatpush2.msra.mxu0 0.0
  %160 = vmatprep.subr.mxu0 0.0
  %161 = vmatpush2.msra.mxu0 0.0
  %162 = vmatprep.subr.mxu0 0.0
  %163 = vmatpush2.msra.mxu0 0.0
  %164 = vmatprep.subr.mxu0 0.0
  %165 = vmatpush2.msra.mxu0 0.0
  %166 = vmatprep.subr.mxu0 0.0
  %167 = vmatpush2.msra.mxu0 0.0
  %168 = vmatprep.subr.mxu0 0.0
  %169 = vmatpush2.msra.mxu0 0.0
  %170 = vmatprep.subr.mxu0 0.0
  %171 = vmatpush2.msra.mxu0 0.0
  %172 = vmatprep.subr.mxu0 0.0
  %173 = vmatpush2.msra.mxu0 0.0
  %174 = vmatprep.subr.mxu0 0.0
  %175 = vmatpush2.msra.mxu0 0.0
  %176 = vmatprep.subr.mxu0 0.0
  %177 = vmatpush2.msra.mxu0 0.0
  %178 = vmatprep.mubr.f32.mxu0 0.0
  %179 = vmatmul.mubr.f32.gmra.mxu0 %v26
  %v180 = vpop.f32.mrf.mxu0
  %v181 = vadd.f32 %v20, %v180
  %v182 = vpop.f32.mrf.mxu0
  %v183 = vadd.f32 %v20, %v182
  %184 = vdwg.mxu0
  %s185 = scalar_lea.vmem %s3, 16
  %186 = vst [vmem:[%s185] sm:$0xff] %v181
  %187 = vst [vmem:[%s185 + $0x8] sm:$0xff] %v183
  // Predicated region
  $region14: #{batch_ensemble_forward.1} parent=0 // pred_check
    _
  $region15: #{batch_ensemble_forward.1} parent=0 // pred_check_branch
    %189 = sbr.rel (0) target = $region17
  $region16: #{batch_ensemble_forward.1} parent=0 // pred_region
    _
  $region17: #{batch_ensemble_forward.1} parent=0 // pred_fallthru
    _
  // Predicated region
  $region18: #{batch_ensemble_forward.1} parent=0 // pred_check
    _
  $region19: #{batch_ensemble_forward.1} parent=0 // pred_check_branch
    %191 = sbr.rel (0) target = $region21
  $region20: #{batch_ensemble_forward.1} parent=0 // pred_region
    _
  $region21: #{batch_ensemble_forward.1} parent=0 // pred_fallthru
    _

</llo_original>
